<compile_context>
chip_gen: v5e
topology: v5e:2x2
jax: 0.10.0
libtpu: 0.0.40
codegen_flags: <defaults>
</compile_context>

<pallas_src>
import functools

import jax
import jax.numpy as jnp
from jax import lax
from jax.experimental import pallas as pl
from jax.experimental.pallas import tpu as pltpu


def _mlp_kernel(type_ref, value_ref, batch_ref, ttab_ref, vtab_ref,
                wt_ref, wv_ref, b_ref, o_ref, *, pooling):
    n = type_ref.shape[0]
    type_nums = ttab_ref.shape[0]
    value_nums = vtab_ref.shape[0]
    num_graphs = o_ref.shape[0]

    # ---- embedding lookups as one-hot matmuls (MXU-friendly gather) ----
    t_idx = type_ref[...]                                   # (n, 1) int32
    v_idx = value_ref[...]                                  # (n, 1) int32
    t_oh = (lax.broadcasted_iota(jnp.int32, (n, type_nums), 1) == t_idx
            ).astype(jnp.float32)                           # (n, T)
    v_oh = (lax.broadcasted_iota(jnp.int32, (n, value_nums), 1) == v_idx
            ).astype(jnp.float32)                           # (n, V)
    h_t = jnp.dot(t_oh, ttab_ref[...], preferred_element_type=jnp.float32)
    h_v = jnp.dot(v_oh, vtab_ref[...], preferred_element_type=jnp.float32)

    # ---- segment pooling over `batch` (padded nodes have batch == -1) ----
    b_idx = batch_ref[...]                                  # (1, n) int32
    seg = lax.broadcasted_iota(jnp.int32, (num_graphs, n), 0) == b_idx  # (G, n)

    if pooling in ("sum", "mean"):
        seg_f = seg.astype(jnp.float32)
        p_t = jnp.dot(seg_f, h_t, preferred_element_type=jnp.float32)   # (G, emb)
        p_v = jnp.dot(seg_f, h_v, preferred_element_type=jnp.float32)   # (G, emb)
        if pooling == "mean":
            counts = jnp.maximum(jnp.sum(seg_f, axis=1, keepdims=True), 1.0)
            inv = 1.0 / counts
            p_t = p_t * inv
            p_v = p_v * inv
    elif pooling == "max":
        # Masked lane-reduction: arrange nodes on the lane axis and reduce it.
        neg = jnp.float32(-3.4e38)
        m3 = seg[:, None, :]                                # (G, 1, n)
        ht_t = jnp.transpose(h_t)                           # (emb, n)
        hv_t = jnp.transpose(h_v)                           # (emb, n)
        p_t = jnp.max(jnp.where(m3, ht_t[None, :, :], neg), axis=-1)    # (G, emb)
        p_v = jnp.max(jnp.where(m3, hv_t[None, :, :], neg), axis=-1)    # (G, emb)
    else:
        raise ValueError(f"unknown pooling: {pooling}")

    # ---- predict: Linear(2*emb_dim, 1), weight split over the concat halves ----
    out = (jnp.dot(p_t, wt_ref[...], preferred_element_type=jnp.float32)
           + jnp.dot(p_v, wv_ref[...], preferred_element_type=jnp.float32)
           + b_ref[...])
    o_ref[...] = out.astype(o_ref.dtype)


@functools.partial(jax.jit, static_argnames=("pooling", "num_graphs"))
def mlp_forward(type_idx, value_idx, batch_idx, type_table, value_table,
                w_pred_t, b_pred, *, pooling, num_graphs):
    """Pallas implementation of MLPModel.forward.

    type_idx:  (N,)  int   node type ids
    value_idx: (N,)  int   node value ids
    batch_idx: (N,)  int   graph id per node (0..num_graphs-1)
    type_table:  (type_nums,  emb_dim) f32
    value_table: (value_nums, emb_dim) f32
    w_pred_t:  (2*emb_dim, 1) f32   transposed torch Linear weight
    b_pred:    (1,)           f32
    returns:   (num_graphs, 1) f32
    """
    n = type_idx.shape[0]
    emb_dim = type_table.shape[1]

    # Pad node dim to a multiple of 8 (sublane-friendly); padded nodes get
    # batch id -1 so they never match any graph row of the segment one-hot.
    n_pad = max(8, -(-n // 8) * 8)
    pad = n_pad - n
    t = jnp.pad(type_idx.astype(jnp.int32), (0, pad)).reshape(n_pad, 1)
    v = jnp.pad(value_idx.astype(jnp.int32), (0, pad)).reshape(n_pad, 1)
    b = jnp.pad(batch_idx.astype(jnp.int32), (0, pad),
                constant_values=-1).reshape(1, n_pad)

    w_t = w_pred_t[:emb_dim, :].astype(jnp.float32)   # (emb_dim, 1)
    w_v = w_pred_t[emb_dim:, :].astype(jnp.float32)   # (emb_dim, 1)
    bias = b_pred.reshape(1, 1).astype(jnp.float32)

    type_nums = type_table.shape[0]
    value_nums = value_table.shape[0]
    flops = (2 * n_pad * type_nums * emb_dim            # type one-hot gather
             + 2 * n_pad * value_nums * emb_dim         # value one-hot gather
             + 2 * num_graphs * n_pad * 2 * emb_dim     # segment pooling
             + 2 * num_graphs * 2 * emb_dim)            # predict head
    bytes_accessed = 4 * (t.size + v.size + b.size
                          + type_table.size + value_table.size
                          + w_pred_t.size + 1 + num_graphs)

    vmem = pl.BlockSpec(memory_space=pltpu.MemorySpace.VMEM)
    return pl.pallas_call(
        functools.partial(_mlp_kernel, pooling=pooling),
        out_shape=jax.ShapeDtypeStruct((num_graphs, 1), jnp.float32),
        in_specs=[vmem] * 8,
        out_specs=vmem,
        cost_estimate=pl.CostEstimate(flops=flops, transcendentals=0,
                                      bytes_accessed=bytes_accessed),
    )(t, v, b, type_table.astype(jnp.float32), value_table.astype(jnp.float32),
      w_t, w_v, bias)


def _mlp_ref(type_idx, value_idx, batch_idx, ttab, vtab, w_pred_t, b_pred,
             pooling, num_graphs):
    """Pure-JAX reference (same math as the PyTorch module)."""
    h = jnp.concatenate([ttab[type_idx], vtab[value_idx]], axis=1)
    if pooling == "sum":
        g = jax.ops.segment_sum(h, batch_idx, num_segments=num_graphs)
    elif pooling == "mean":
        s = jax.ops.segment_sum(h, batch_idx, num_segments=num_graphs)
        c = jax.ops.segment_sum(jnp.ones((h.shape[0], 1), h.dtype), batch_idx,
                                num_segments=num_graphs)
        g = s / jnp.maximum(c, 1.0)
    elif pooling == "max":
        g = jax.ops.segment_max(h, batch_idx, num_segments=num_graphs)
    else:
        raise ValueError(pooling)
    return g @ w_pred_t + b_pred.reshape(1, 1)


if __name__ == "__main__":
    key = jax.random.PRNGKey(0)
    k1, k2, k3, k4, k5, k6 = jax.random.split(key, 6)

    # Small shapes consistent with the module: N nodes across G graphs.
    N, EMB_DIM, TYPE_NUMS, VALUE_NUMS, NUM_GRAPHS = 64, 32, 12, 20, 4

    type_idx = jax.random.randint(k1, (N,), 0, TYPE_NUMS, dtype=jnp.int32)
    value_idx = jax.random.randint(k2, (N,), 0, VALUE_NUMS, dtype=jnp.int32)
    batch_idx = jnp.repeat(jnp.arange(NUM_GRAPHS, dtype=jnp.int32),
                           N // NUM_GRAPHS)

    # torch-style init: Embedding ~ N(0,1); Linear ~ U(-1/sqrt(fan_in), ...).
    ttab = jax.random.normal(k3, (TYPE_NUMS, EMB_DIM), jnp.float32)
    vtab = jax.random.normal(k4, (VALUE_NUMS, EMB_DIM), jnp.float32)
    bound = 1.0 / (2 * EMB_DIM) ** 0.5
    w_pred_t = jax.random.uniform(k5, (2 * EMB_DIM, 1), jnp.float32,
                                  -bound, bound)
    b_pred = jax.random.uniform(k6, (1,), jnp.float32, -bound, bound)

    for pooling in ("mean", "sum"):
        y = mlp_forward(type_idx, value_idx, batch_idx, ttab, vtab,
                        w_pred_t, b_pred, pooling=pooling,
                        num_graphs=NUM_GRAPHS)
        y = jax.block_until_ready(y)
        y_ref = _mlp_ref(type_idx, value_idx, batch_idx, ttab, vtab,
                         w_pred_t, b_pred, pooling, NUM_GRAPHS)
        assert y.shape == (NUM_GRAPHS, 1)
        assert jnp.allclose(y, y_ref, atol=1e-5, rtol=1e-5), (pooling, y, y_ref)

    print("KERNEL_OK")
</pallas_src>

<mosaic_0001>
module attributes {stable_mosaic.version = 11 : i64} {
  func.func @_mlp_kernel(%arg0: memref<64x1xi32, #tpu.memory_space<vmem>>, %arg1: memref<64x1xi32, #tpu.memory_space<vmem>>, %arg2: memref<1x64xi32, #tpu.memory_space<vmem>>, %arg3: memref<12x32xf32, #tpu.memory_space<vmem>>, %arg4: memref<20x32xf32, #tpu.memory_space<vmem>>, %arg5: memref<32x1xf32, #tpu.memory_space<vmem>>, %arg6: memref<32x1xf32, #tpu.memory_space<vmem>>, %arg7: memref<1x1xf32, #tpu.memory_space<vmem>>, %arg8: memref<4x1xf32, #tpu.memory_space<vmem>>) attributes {dimension_semantics = [], scalar_prefetch = 0 : i64, scratch_operands = 0 : i64, tpu.core_type = #tpu.core_type<tc>} {
    %c0 = arith.constant 0 : index
    %c0_0 = arith.constant 0 : index
    %0 = vector.load %arg0[%c0, %c0_0] : memref<64x1xi32, #tpu.memory_space<vmem>>, vector<64x1xi32>
    %c0_1 = arith.constant 0 : index
    %c0_2 = arith.constant 0 : index
    %1 = vector.load %arg1[%c0_1, %c0_2] : memref<64x1xi32, #tpu.memory_space<vmem>>, vector<64x1xi32>
    %2 = tpu.iota {dimensions = array<i32: 1>} : vector<64x12xi32>
    %3 = vector.broadcast %0 : vector<64x1xi32> to vector<64x12xi32>
    %4 = arith.cmpi eq, %2, %3 : vector<64x12xi32>
    %5 = arith.extui %4 : vector<64x12xi1> to vector<64x12xi32>
    %6 = arith.sitofp %5 : vector<64x12xi32> to vector<64x12xf32>
    %7 = tpu.iota {dimensions = array<i32: 1>} : vector<64x20xi32>
    %8 = vector.broadcast %1 : vector<64x1xi32> to vector<64x20xi32>
    %9 = arith.cmpi eq, %7, %8 : vector<64x20xi32>
    %10 = arith.extui %9 : vector<64x20xi1> to vector<64x20xi32>
    %11 = arith.sitofp %10 : vector<64x20xi32> to vector<64x20xf32>
    %c0_3 = arith.constant 0 : index
    %c0_4 = arith.constant 0 : index
    %12 = vector.load %arg3[%c0_3, %c0_4] : memref<12x32xf32, #tpu.memory_space<vmem>>, vector<12x32xf32>
    %cst = arith.constant dense<0.000000e+00> : vector<64x32xf32>
    %13 = tpu.matmul %6, %12, %cst {dimension_numbers = #tpu.dot_dimension_numbers<[1], [0], [0], [1], [0, 0, 1, 1], [], []>} : vector<64x12xf32>, vector<12x32xf32>, vector<64x32xf32> -> vector<64x32xf32>
    %c0_5 = arith.constant 0 : index
    %c0_6 = arith.constant 0 : index
    %14 = vector.load %arg4[%c0_5, %c0_6] : memref<20x32xf32, #tpu.memory_space<vmem>>, vector<20x32xf32>
    %cst_7 = arith.constant dense<0.000000e+00> : vector<64x32xf32>
    %15 = tpu.matmul %11, %14, %cst_7 {dimension_numbers = #tpu.dot_dimension_numbers<[1], [0], [0], [1], [0, 0, 1, 1], [], []>} : vector<64x20xf32>, vector<20x32xf32>, vector<64x32xf32> -> vector<64x32xf32>
    %c0_8 = arith.constant 0 : index
    %c0_9 = arith.constant 0 : index
    %16 = vector.load %arg2[%c0_8, %c0_9] : memref<1x64xi32, #tpu.memory_space<vmem>>, vector<1x64xi32>
    %17 = tpu.iota {dimensions = array<i32: 0>} : vector<4x64xi32>
    %18 = vector.broadcast %16 : vector<1x64xi32> to vector<4x64xi32>
    %19 = arith.cmpi eq, %17, %18 : vector<4x64xi32>
    %20 = arith.extui %19 : vector<4x64xi1> to vector<4x64xi32>
    %21 = arith.sitofp %20 : vector<4x64xi32> to vector<4x64xf32>
    %cst_10 = arith.constant dense<0.000000e+00> : vector<4x32xf32>
    %22 = tpu.matmul %21, %13, %cst_10 {dimension_numbers = #tpu.dot_dimension_numbers<[1], [0], [0], [1], [0, 0, 1, 1], [], []>} : vector<4x64xf32>, vector<64x32xf32>, vector<4x32xf32> -> vector<4x32xf32>
    %cst_11 = arith.constant dense<0.000000e+00> : vector<4x32xf32>
    %23 = tpu.matmul %21, %15, %cst_11 {dimension_numbers = #tpu.dot_dimension_numbers<[1], [0], [0], [1], [0, 0, 1, 1], [], []>} : vector<4x64xf32>, vector<64x32xf32>, vector<4x32xf32> -> vector<4x32xf32>
    %cst_12 = arith.constant dense<0.000000e+00> : vector<4xf32>
    %24 = vector.multi_reduction <add>, %21, %cst_12 [1] : vector<4x64xf32> to vector<4xf32>
    %25 = vector.shape_cast %24 : vector<4xf32> to vector<4x1xf32>
    %cst_13 = arith.constant 1.000000e+00 : f32
    %26 = vector.broadcast %cst_13 : f32 to vector<4x1xf32>
    %27 = arith.maximumf %25, %26 : vector<4x1xf32>
    %cst_14 = arith.constant 1.000000e+00 : f32
    %28 = vector.broadcast %cst_14 : f32 to vector<4x1xf32>
    %29 = arith.divf %28, %27 : vector<4x1xf32>
    %30 = vector.broadcast %29 : vector<4x1xf32> to vector<4x32xf32>
    %31 = arith.mulf %22, %30 : vector<4x32xf32>
    %32 = vector.broadcast %29 : vector<4x1xf32> to vector<4x32xf32>
    %33 = arith.mulf %23, %32 : vector<4x32xf32>
    %c0_15 = arith.constant 0 : index
    %c0_16 = arith.constant 0 : index
    %34 = vector.load %arg5[%c0_15, %c0_16] : memref<32x1xf32, #tpu.memory_space<vmem>>, vector<32x1xf32>
    %cst_17 = arith.constant dense<0.000000e+00> : vector<4x1xf32>
    %35 = tpu.matmul %31, %34, %cst_17 {dimension_numbers = #tpu.dot_dimension_numbers<[1], [0], [0], [1], [0, 0, 1, 1], [], []>} : vector<4x32xf32>, vector<32x1xf32>, vector<4x1xf32> -> vector<4x1xf32>
    %c0_18 = arith.constant 0 : index
    %c0_19 = arith.constant 0 : index
    %36 = vector.load %arg6[%c0_18, %c0_19] : memref<32x1xf32, #tpu.memory_space<vmem>>, vector<32x1xf32>
    %cst_20 = arith.constant dense<0.000000e+00> : vector<4x1xf32>
    %37 = tpu.matmul %33, %36, %cst_20 {dimension_numbers = #tpu.dot_dimension_numbers<[1], [0], [0], [1], [0, 0, 1, 1], [], []>} : vector<4x32xf32>, vector<32x1xf32>, vector<4x1xf32> -> vector<4x1xf32>
    %38 = arith.addf %35, %37 : vector<4x1xf32>
    %c0_21 = arith.constant 0 : index
    %c0_22 = arith.constant 0 : index
    %39 = vector.load %arg7[%c0_21, %c0_22] : memref<1x1xf32, #tpu.memory_space<vmem>>, vector<1x1xf32>
    %40 = vector.broadcast %39 : vector<1x1xf32> to vector<4x1xf32>
    %41 = arith.addf %38, %40 : vector<4x1xf32>
    %c0_23 = arith.constant 0 : index
    %c0_24 = arith.constant 0 : index
    %42 = vector.load %arg8[%c0_23, %c0_24] : memref<4x1xf32, #tpu.memory_space<vmem>>, vector<4x1xf32>
    tpu.vector_store %arg8[%c0_23, %c0_24], %41 {strides = array<i32>} : memref<4x1xf32, #tpu.memory_space<vmem>>, vector<4x1xf32>,
    return
  }
}

</mosaic_0001>

<llo_original>
// kernel: mlp_forward.1
$region0: #{mlp_forward.1}
  #allocation0 [shape = 'u32[]', space=smem, size = 0x4, offset = 0x4, fixed_abs, tag = 'smem constant byte address 0x4 - core index']
  #allocation1 [shape = 'u32[72,128]{1,0:T(1,128)}', space=vmem, size = 0x9000, scoped, tag = 'internal scratch']
  #allocation2 [shape = 'f32[1,1]{1,0:T(1,128)S(1)}', space=vmem, size = 0x200, scoped, tag = 'scoped memory for mlp_forward.1']
  %s0 = inlined_call_operand.vmem [shape: s32[64,1], index: 0, kind: input, shape index: {}]
  %s1 = inlined_call_operand.vmem [shape: s32[64,1], index: 1, kind: input, shape index: {}]
  %s2 = inlined_call_operand.vmem [shape: s32[1,64], index: 2, kind: input, shape index: {}]
  %s3 = inlined_call_operand.vmem [shape: f32[12,32], index: 3, kind: input, shape index: {}]
  %s4 = inlined_call_operand.vmem [shape: f32[20,32], index: 4, kind: input, shape index: {}]
  %s5 = inlined_call_operand.vmem [shape: f32[32,1], index: 5, kind: input, shape index: {}]
  %s6 = inlined_call_operand.vmem [shape: f32[32,1], index: 6, kind: input, shape index: {}]
  %s7 = inlined_call_operand.<no memory space> [shape: f32[1,1], index: 7, kind: input, shape index: {}]
  %s8 = inlined_call_operand.vmem [shape: f32[4,1], index: 8, kind: output, shape index: {}]
  %s9 = sld [smem:[#allocation0]]
  $region42: #{mlp_forward.1} parent=0
    _
  %s11 = ssub.s32 1, %s9
  %s12 = scalar_select 0, %s11, %s9
  %v13 = vstv %s7
  %14 = vst [vmem:[#allocation2] sm:$0x1] %v13
  // Predicated region
  $region2: #{mlp_forward.1} parent=0 // pred_check
    _
  $region3: #{mlp_forward.1} parent=0 // pred_check_branch
    %16 = sbr.rel (0) target = $region5
  $region4: #{mlp_forward.1} parent=0 // pred_region
    _
  $region5: #{mlp_forward.1} parent=0 // pred_fallthru
    _
  // Predicated region
  $region6: #{mlp_forward.1} parent=0 // pred_check
    _
  $region7: #{mlp_forward.1} parent=0 // pred_check_branch
    %18 = sbr.rel (0) target = $region9
  $region8: #{mlp_forward.1} parent=0 // pred_region
    _
  $region9: #{mlp_forward.1} parent=0 // pred_fallthru
    _
  // Predicated region
  $region10: #{mlp_forward.1} parent=0 // pred_check
    _
  $region11: #{mlp_forward.1} parent=0 // pred_check_branch
    %20 = sbr.rel (0) target = $region13
  $region12: #{mlp_forward.1} parent=0 // pred_region
    _
  $region13: #{mlp_forward.1} parent=0 // pred_fallthru
    _
  // Predicated region
  $region14: #{mlp_forward.1} parent=0 // pred_check
    _
  $region15: #{mlp_forward.1} parent=0 // pred_check_branch
    %22 = sbr.rel (0) target = $region17
  $region16: #{mlp_forward.1} parent=0 // pred_region
    _
  $region17: #{mlp_forward.1} parent=0 // pred_fallthru
    _
  // Predicated region
  $region18: #{mlp_forward.1} parent=0 // pred_check
    _
  $region19: #{mlp_forward.1} parent=0 // pred_check_branch
    %24 = sbr.rel (0) target = $region21
  $region20: #{mlp_forward.1} parent=0 // pred_region
    _
  $region21: #{mlp_forward.1} parent=0 // pred_fallthru
    _
  // Predicated region
  $region22: #{mlp_forward.1} parent=0 // pred_check
    _
  $region23: #{mlp_forward.1} parent=0 // pred_check_branch
    %26 = sbr.rel (0) target = $region25
  $region24: #{mlp_forward.1} parent=0 // pred_region
    _
  $region25: #{mlp_forward.1} parent=0 // pred_fallthru
    _
  // Predicated region
  $region26: #{mlp_forward.1} parent=0 // pred_check
    _
  $region27: #{mlp_forward.1} parent=0 // pred_check_branch
    %28 = sbr.rel (0) target = $region29
  $region28: #{mlp_forward.1} parent=0 // pred_region
    _
  $region29: #{mlp_forward.1} parent=0 // pred_fallthru
    _
  // Predicated region
  $region30: #{mlp_forward.1} parent=0 // pred_check
    _
  $region31: #{mlp_forward.1} parent=0 // pred_check_branch
    %30 = sbr.rel (0) target = $region33
  $region32: #{mlp_forward.1} parent=0 // pred_region
    _
  $region33: #{mlp_forward.1} parent=0 // pred_fallthru
    _
  %v31 = vld [vmem:[%s0] sm:$0xff]
  %v32 = vld [vmem:[%s0 + $0x8] sm:$0xff]
  %v33 = vld [vmem:[%s0 + $0x10] sm:$0xff]
  %v34 = vld [vmem:[%s0 + $0x18] sm:$0xff]
  %v35 = vld [vmem:[%s0 + $0x20] sm:$0xff]
  %v36 = vld [vmem:[%s0 + $0x28] sm:$0xff]
  %v37 = vld [vmem:[%s0 + $0x30] sm:$0xff]
  %v38 = vld [vmem:[%s0 + $0x38] sm:$0xff]
  %v39 = vld [vmem:[%s1] sm:$0xff]
  %v40 = vld [vmem:[%s1 + $0x8] sm:$0xff]
  %v41 = vld [vmem:[%s1 + $0x10] sm:$0xff]
  %v42 = vld [vmem:[%s1 + $0x18] sm:$0xff]
  %v43 = vld [vmem:[%s1 + $0x20] sm:$0xff]
  %v44 = vld [vmem:[%s1 + $0x28] sm:$0xff]
  %v45 = vld [vmem:[%s1 + $0x30] sm:$0xff]
  %v46 = vld [vmem:[%s1 + $0x38] sm:$0xff]
  %v47 = vlaneseq
  %v48 = vand.u32 %v47, 127
  %49 = vset.pattern.permute.xlu0 0
  %50 = vperm.xlu0 %49, %v31
  %v51 = vpop.permute.xlu0 %50
  %52 = vset.pattern.permute.xlu0 0
  %53 = vperm.xlu0 %52, %v32
  %v54 = vpop.permute.xlu0 %53
  %55 = vset.pattern.permute.xlu0 0
  %56 = vperm.xlu0 %55, %v33
  %v57 = vpop.permute.xlu0 %56
  %58 = vset.pattern.permute.xlu0 0
  %59 = vperm.xlu0 %58, %v34
  %v60 = vpop.permute.xlu0 %59
  %61 = vset.pattern.permute.xlu0 0
  %62 = vperm.xlu0 %61, %v35
  %v63 = vpop.permute.xlu0 %62
  %64 = vset.pattern.permute.xlu0 0
  %65 = vperm.xlu0 %64, %v36
  %v66 = vpop.permute.xlu0 %65
  %67 = vset.pattern.permute.xlu0 0
  %68 = vperm.xlu0 %67, %v37
  %v69 = vpop.permute.xlu0 %68
  %70 = vset.pattern.permute.xlu0 0
  %71 = vperm.xlu0 %70, %v38
  %v72 = vpop.permute.xlu0 %71
  %vm73 = vcmp.eq.s32.totalorder %v48, %v51
  %vm74 = vcmp.eq.s32.totalorder %v48, %v54
  %vm75 = vcmp.eq.s32.totalorder %v48, %v57
  %vm76 = vcmp.eq.s32.totalorder %v48, %v60
  %vm77 = vcmp.eq.s32.totalorder %v48, %v63
  %vm78 = vcmp.eq.s32.totalorder %v48, %v66
  %vm79 = vcmp.eq.s32.totalorder %v48, %v69
  %vm80 = vcmp.eq.s32.totalorder %v48, %v72
  %v81 = vsel %vm73, 1, 0
  %v82 = vsel %vm74, 1, 0
  %v83 = vsel %vm75, 1, 0
  %v84 = vsel %vm76, 1, 0
  %v85 = vsel %vm77, 1, 0
  %v86 = vsel %vm78, 1, 0
  %v87 = vsel %vm79, 1, 0
  %v88 = vsel %vm80, 1, 0
  %v89 = vcvt.s32.f32 %v81
  %v90 = vcvt.s32.f32 %v82
  %v91 = vcvt.s32.f32 %v83
  %v92 = vcvt.s32.f32 %v84
  %v93 = vcvt.s32.f32 %v85
  %v94 = vcvt.s32.f32 %v86
  %v95 = vcvt.s32.f32 %v87
  %v96 = vcvt.s32.f32 %v88
  %97 = vset.pattern.permute.xlu0 0
  %98 = vperm.xlu0 %97, %v39
  %v99 = vpop.permute.xlu0 %98
  %100 = vset.pattern.permute.xlu0 0
  %101 = vperm.xlu0 %100, %v40
  %v102 = vpop.permute.xlu0 %101
  %103 = vset.pattern.permute.xlu0 0
  %104 = vperm.xlu0 %103, %v41
  %v105 = vpop.permute.xlu0 %104
  %106 = vset.pattern.permute.xlu0 0
  %107 = vperm.xlu0 %106, %v42
  %v108 = vpop.permute.xlu0 %107
  %109 = vset.pattern.permute.xlu0 0
  %110 = vperm.xlu0 %109, %v43
  %v111 = vpop.permute.xlu0 %110
  %112 = vset.pattern.permute.xlu0 0
  %113 = vperm.xlu0 %112, %v44
  %v114 = vpop.permute.xlu0 %113
  %115 = vset.pattern.permute.xlu0 0
  %116 = vperm.xlu0 %115, %v45
  %v117 = vpop.permute.xlu0 %116
  %118 = vset.pattern.permute.xlu0 0
  %119 = vperm.xlu0 %118, %v46
  %v120 = vpop.permute.xlu0 %119
  %vm121 = vcmp.eq.s32.totalorder %v48, %v99
  %vm122 = vcmp.eq.s32.totalorder %v48, %v102
  %vm123 = vcmp.eq.s32.totalorder %v48, %v105
  %vm124 = vcmp.eq.s32.totalorder %v48, %v108
  %vm125 = vcmp.eq.s32.totalorder %v48, %v111
  %vm126 = vcmp.eq.s32.totalorder %v48, %v114
  %vm127 = vcmp.eq.s32.totalorder %v48, %v117
  %vm128 = vcmp.eq.s32.totalorder %v48, %v120
  %v129 = vsel %vm121, 1, 0
  %v130 = vsel %vm122, 1, 0
  %v131 = vsel %vm123, 1, 0
  %v132 = vsel %vm124, 1, 0
  %v133 = vsel %vm125, 1, 0
  %v134 = vsel %vm126, 1, 0
  %v135 = vsel %vm127, 1, 0
  %v136 = vsel %vm128, 1, 0
  %v137 = vcvt.s32.f32 %v129
  %v138 = vcvt.s32.f32 %v130
  %v139 = vcvt.s32.f32 %v131
  %v140 = vcvt.s32.f32 %v132
  %v141 = vcvt.s32.f32 %v133
  %v142 = vcvt.s32.f32 %v134
  %v143 = vcvt.s32.f32 %v135
  %v144 = vcvt.s32.f32 %v136
  %v145 = vld [vmem:[%s3] sm:$0xff]
  %v146 = vld [vmem:[%s3 + $0x8] sm:$0xf]
  %vm147 = vcmask 97280
  %v149 = vsel %vm147, %v89, 0
  %v152 = vsel %vm147, %v90, 0
  %v155 = vsel %vm147, %v91, 0
  %v158 = vsel %vm147, %v92, 0
  %v161 = vsel %vm147, %v93, 0
  %v164 = vsel %vm147, %v94, 0
  %v167 = vsel %vm147, %v95, 0
  %v170 = vsel %vm147, %v96, 0
  %vm172 = vcmask 1043456
  %v174 = vsel %vm172, %v146, 0
  %176 = vmatpush.msra.mxu0 0.0
  %177 = vmatpush.msra.mxu0 0.0
  %178 = vmatpush.msra.mxu0 0.0
  %179 = vmatpush.msra.mxu0 0.0
  %180 = vmatpush.msra.mxu0 0.0
  %181 = vmatpush.msra.mxu0 0.0
  %182 = vmatpush.msra.mxu0 0.0
  %183 = vmatpush.msra.mxu0 0.0
  %184 = vmatpush.msra.mxu0 0.0
  %185 = vmatpush.msra.mxu0 0.0
  %186 = vmatpush.msra.mxu0 0.0
  %187 = vmatpush.msra.mxu0 0.0
  %188 = vmatpush.msra.mxu0 0.0
  %189 = vmatpush.msra.mxu0 0.0
  %190 = vmatpush.msra.mxu0 %v174
  %191 = vmatpush.msra.mxu0 %v145
  %192 = vmatmul.f32.gmra.mxu0 %v149
  %v193 = vpop.f32.mrf.mxu0
  %v194 = vadd.f32 0.0, %v193
  %195 = vmatmul.f32.gmra.mxu0 %v152
  %v196 = vpop.f32.mrf.mxu0
  %v197 = vadd.f32 0.0, %v196
  %198 = vmatmul.f32.gmra.mxu0 %v155
  %v199 = vpop.f32.mrf.mxu0
  %v200 = vadd.f32 0.0, %v199
  %201 = vmatmul.f32.gmra.mxu0 %v158
  %v202 = vpop.f32.mrf.mxu0
  %v203 = vadd.f32 0.0, %v202
  %204 = vmatmul.f32.gmra.mxu0 %v161
  %v205 = vpop.f32.mrf.mxu0
  %v206 = vadd.f32 0.0, %v205
  %207 = vmatmul.f32.gmra.mxu0 %v164
  %v208 = vpop.f32.mrf.mxu0
  %v209 = vadd.f32 0.0, %v208
  %210 = vmatmul.f32.gmra.mxu0 %v167
  %v211 = vpop.f32.mrf.mxu0
  %v212 = vadd.f32 0.0, %v211
  %213 = vmatmul.f32.gmra.mxu0 %v170
  %v214 = vpop.f32.mrf.mxu0
  %v215 = vadd.f32 0.0, %v214
  %216 = vdwg.mxu0
  %v217 = vld [vmem:[%s4] sm:$0xff]
  %v218 = vld [vmem:[%s4 + $0x8] sm:$0xff]
  %v219 = vld [vmem:[%s4 + $0x10] sm:$0xf]
  %vm220 = vcmask 162816
  %v222 = vsel %vm220, %v137, 0
  %v225 = vsel %vm220, %v138, 0
  %v228 = vsel %vm220, %v139, 0
  %v231 = vsel %vm220, %v140, 0
  %v234 = vsel %vm220, %v141, 0
  %v237 = vsel %vm220, %v142, 0
  %v240 = vsel %vm220, %v143, 0
  %v243 = vsel %vm220, %v144, 0
  %v246 = vsel %vm172, %v219, 0
  %248 = vmatpush.msra.mxu0 0.0
  %249 = vmatpush.msra.mxu0 0.0
  %250 = vmatpush.msra.mxu0 0.0
  %251 = vmatpush.msra.mxu0 0.0
  %252 = vmatpush.msra.mxu0 0.0
  %253 = vmatpush.msra.mxu0 0.0
  %254 = vmatpush.msra.mxu0 0.0
  %255 = vmatpush.msra.mxu0 0.0
  %256 = vmatpush.msra.mxu0 0.0
  %257 = vmatpush.msra.mxu0 0.0
  %258 = vmatpush.msra.mxu0 0.0
  %259 = vmatpush.msra.mxu0 0.0
  %260 = vmatpush.msra.mxu0 0.0
  %261 = vmatpush.msra.mxu0 %v246
  %262 = vmatpush.msra.mxu0 %v218
  %263 = vmatpush.msra.mxu0 %v217
  %264 = vmatmul.f32.gmra.mxu0 %v222
  %v265 = vpop.f32.mrf.mxu0
  %v266 = vadd.f32 0.0, %v265
  %267 = vmatmul.f32.gmra.mxu0 %v225
  %v268 = vpop.f32.mrf.mxu0
  %v269 = vadd.f32 0.0, %v268
  %270 = vmatmul.f32.gmra.mxu0 %v228
  %v271 = vpop.f32.mrf.mxu0
  %v272 = vadd.f32 0.0, %v271
  %273 = vmatmul.f32.gmra.mxu0 %v231
  %v274 = vpop.f32.mrf.mxu0
  %v275 = vadd.f32 0.0, %v274
  %276 = vmatmul.f32.gmra.mxu0 %v234
  %v277 = vpop.f32.mrf.mxu0
  %v278 = vadd.f32 0.0, %v277
  %279 = vmatmul.f32.gmra.mxu0 %v237
  %v280 = vpop.f32.mrf.mxu0
  %v281 = vadd.f32 0.0, %v280
  %282 = vmatmul.f32.gmra.mxu0 %v240
  %v283 = vpop.f32.mrf.mxu0
  %v284 = vadd.f32 0.0, %v283
  %285 = vmatmul.f32.gmra.mxu0 %v243
  %v286 = vpop.f32.mrf.mxu0
  %v287 = vadd.f32 0.0, %v286
  %288 = vdwg.mxu0
  %v289 = vld [vmem:[%s2] sm:$0x1]
  %v290 = vlaneseq
  %v291 = vshrl.u32 %v290, 7
  %v292 = vperm.slane %v289, 0
  %vm293 = vcmp.eq.s32.totalorder %v291, %v292
  %v294 = vsel %vm293, 1, 0
  %v295 = vcvt.s32.f32 %v294
  %vm296 = vcmask 523264
  %v298 = vsel %vm296, %v295, 0
  %300 = vmatpush.msra.mxu0 0.0
  %301 = vmatpush.msra.mxu0 0.0
  %302 = vmatpush.msra.mxu0 0.0
  %303 = vmatpush.msra.mxu0 0.0
  %304 = vmatpush.msra.mxu0 0.0
  %305 = vmatpush.msra.mxu0 0.0
  %306 = vmatpush.msra.mxu0 0.0
  %307 = vmatpush.msra.mxu0 0.0
  %308 = vmatpush.msra.mxu0 %v215
  %309 = vmatpush.msra.mxu0 %v212
  %310 = vmatpush.msra.mxu0 %v209
  %311 = vmatpush.msra.mxu0 %v206
  %312 = vmatpush.msra.mxu0 %v203
  %313 = vmatpush.msra.mxu0 %v200
  %314 = vmatpush.msra.mxu0 %v197
  %315 = vmatpush.msra.mxu0 %v194
  %316 = vmatmul.f32.gmra.mxu0 %v298
  %v317 = vpop.f32.mrf.mxu0
  %v318 = vadd.f32 0.0, %v317
  %319 = vdwg.mxu0
  %320 = vmatpush.msra.mxu0 0.0
  %321 = vmatpush.msra.mxu0 0.0
  %322 = vmatpush.msra.mxu0 0.0
  %323 = vmatpush.msra.mxu0 0.0
  %324 = vmatpush.msra.mxu0 0.0
  %325 = vmatpush.msra.mxu0 0.0
  %326 = vmatpush.msra.mxu0 0.0
  %327 = vmatpush.msra.mxu0 0.0
  %328 = vmatpush.msra.mxu0 %v287
  %329 = vmatpush.msra.mxu0 %v284
  %330 = vmatpush.msra.mxu0 %v281
  %331 = vmatpush.msra.mxu0 %v278
  %332 = vmatpush.msra.mxu0 %v275
  %333 = vmatpush.msra.mxu0 %v272
  %334 = vmatpush.msra.mxu0 %v269
  %335 = vmatpush.msra.mxu0 %v266
  %336 = vmatmul.f32.gmra.mxu0 %v298
  %v337 = vpop.f32.mrf.mxu0
  %v338 = vadd.f32 0.0, %v337
  %339 = vdwg.mxu0
  %vm340 = vcmask 519168
  %v341 = vsel %vm340, %v295, 0.0
  %342 = vadd.xlane.f32.xlu0 %v341
  %v343 = vpop.xlane.xlu0 %342
  %v344 = vmax.f32 %v343, 1.0
  %v345 = vrcp.pop %v344
  %v346 = vmul.f32 %v344, %v345
  %v347 = vsub.f32 1.0, %v346
  %v348 = vmul.f32 %v345, %v347
  %v349 = vadd.f32 %v345, %v348
  %vm350 = vweird.f32 %v344
  %vm351 = vweird.f32 %v345
  %vm352 = vmor %vm350, %vm351
  %v353 = vsel %vm352, %v345, %v349
  %v354 = vand.u32 2147483647, %v344
  %vm355 = vcmp.eq.f32.partialorder %v354, 8.507059e+37
  %v356 = vand.u32 %v344, 2147483648
  %v357 = vor.u32 1.1754944e-38, %v356
  %v358 = vsel %vm355, %v357, %v353
  %v359 = vmul.f32 1.0, %v358
  %v360 = vmul.f32 %v318, %v359
  %v361 = vmul.f32 %v338, %v359
  %v362 = vld [vmem:[%s5] sm:$0xff]
  %v363 = vld [vmem:[%s5 + $0x8] sm:$0xff]
  %v364 = vld [vmem:[%s5 + $0x10] sm:$0xff]
  %v365 = vld [vmem:[%s5 + $0x18] sm:$0xff]
  %v366 = vld [vmem:[%s6] sm:$0xff]
  %v367 = vld [vmem:[%s6 + $0x8] sm:$0xff]
  %v368 = vld [vmem:[%s6 + $0x10] sm:$0xff]
  %v369 = vld [vmem:[%s6 + $0x18] sm:$0xff]
  %vm370 = vcmask 261120
  %v372 = vsel %vm370, %v361, 0
  %374 = vmatpush.msra.mxu0 0.0
  %375 = vmatpush.msra.mxu0 0.0
  %376 = vmatpush.msra.mxu0 0.0
  %377 = vmatpush.msra.mxu0 0.0
  %378 = vmatpush.msra.mxu0 0.0
  %379 = vmatpush.msra.mxu0 0.0
  %380 = vmatpush.msra.mxu0 0.0
  %381 = vmatpush.msra.mxu0 0.0
  %382 = vmatpush.msra.mxu0 0.0
  %383 = vmatpush.msra.mxu0 0.0
  %384 = vmatpush.msra.mxu0 0.0
  %385 = vmatpush.msra.mxu0 0.0
  %386 = vmatpush.msra.mxu0 %v369
  %387 = vmatpush.msra.mxu0 %v368
  %388 = vmatpush.msra.mxu0 %v367
  %389 = vmatpush.msra.mxu0 %v366
  %390 = vmatmul.f32.gmra.mxu0 %v372
  %v391 = vpop.f32.mrf.mxu0
  %v392 = vadd.f32 0.0, %v391
  %393 = vdwg.mxu0
  %v395 = vsel %vm370, %v360, 0
  %397 = vmatpush.msra.mxu0 0.0
  %398 = vmatpush.msra.mxu0 0.0
  %399 = vmatpush.msra.mxu0 0.0
  %400 = vmatpush.msra.mxu0 0.0
  %401 = vmatpush.msra.mxu0 0.0
  %402 = vmatpush.msra.mxu0 0.0
  %403 = vmatpush.msra.mxu0 0.0
  %404 = vmatpush.msra.mxu0 0.0
  %405 = vmatpush.msra.mxu0 0.0
  %406 = vmatpush.msra.mxu0 0.0
  %407 = vmatpush.msra.mxu0 0.0
  %408 = vmatpush.msra.mxu0 0.0
  %409 = vmatpush.msra.mxu0 %v365
  %410 = vmatpush.msra.mxu0 %v364
  %411 = vmatpush.msra.mxu0 %v363
  %412 = vmatpush.msra.mxu0 %v362
  %413 = vmatmul.f32.gmra.mxu0 %v395
  %v414 = vpop.f32.mrf.mxu0
  %v415 = vadd.f32 %v392, %v414
  %416 = vdwg.mxu0
  %v417 = vld [vmem:[#allocation2] sm:$0x1]
  %v419 = vperm.slane %v417, 0
  %v421 = vadd.f32 %v415, %v419
  %vm422 = vcmask 3072
  %423 = vst.msk [vmem:[%s8] sm:$0xf] %vm422, %v421
  // Predicated region
  $region34: #{mlp_forward.1} parent=0 // pred_check
    _
  $region35: #{mlp_forward.1} parent=0 // pred_check_branch
    %425 = sbr.rel (0) target = $region37
  $region36: #{mlp_forward.1} parent=0 // pred_region
    _
  $region37: #{mlp_forward.1} parent=0 // pred_fallthru
    _
  // Predicated region
  $region38: #{mlp_forward.1} parent=0 // pred_check
    _
  $region39: #{mlp_forward.1} parent=0 // pred_check_branch
    %427 = sbr.rel (0) target = $region41
  $region40: #{mlp_forward.1} parent=0 // pred_region
    _
  $region41: #{mlp_forward.1} parent=0 // pred_fallthru
    _

</llo_original>
